<compile_context>
chip_gen: v6e
topology: v6e:2x2x1
jax: 0.10.0
libtpu: 0.0.40
codegen_flags: <defaults>
</compile_context>

<pallas_src>
import functools

import jax
import jax.numpy as jnp
from jax import lax
from jax.experimental import pallas as pl
from jax.experimental.pallas import tpu as pltpu

BN_EPS = 1e-5
LEAKY_SLOPE = 0.1


def _round_up(x, m):
    return ((x + m - 1) // m) * m


def _conv_tile(x_ref, w_ref, t, *, kh, kw, wp, tile_cols, window):
    """Fused im2col + conv for one lane-dense column tile (stride 1).

    x_ref : (1, C, Lin) zero-extended, spatially padded image flattened
            row-major over the padded (Hp, Wp) plane.
    w_ref : (Oup, kh*kw*C) weight slab, tap-major / channel-minor rows.
    Returns (Oup, tile_cols) f32 conv output for flattened-padded output
    columns [t*tile_cols, (t+1)*tile_cols).

    Every (i, j) tap of the stencil is a pure lane shift (offset i*Wp + j) of
    a single VMEM window; the taps are stacked ONCE into a (kh*kw*C,
    tile_cols) im2col slab and contracted with ONE MXU matmul (K = kh*kw*C).
    """
    base = pl.multiple_of(t * tile_cols, 128)
    win = x_ref[0, :, pl.ds(base, window)]                 # (C, window)
    taps = [win[:, i * wp + j:i * wp + j + tile_cols]      # (C, tile_cols)
            for i in range(kh) for j in range(kw)]
    slab = jnp.concatenate(taps, axis=0)                   # (kh*kw*C, tile_cols)
    return jnp.dot(w_ref[...], slab, preferred_element_type=jnp.float32)


def _valid_mask(t, *, tile_cols, wp, wout, l_full):
    """In-kernel {0,1} f32 mask (1, tile_cols) of valid output columns.

    Excludes the per-row junk columns (ow >= Wout, which wrap into the next
    padded row) and the flat tail padding, so BN statistics stay exact.
    `q mod Wp` is computed with an f32 floor; the +0.5 margin keeps it exact
    for any realistic column count (< 2^21) despite ~1-ulp divide error, and
    avoids relying on vector integer div/rem support.
    """
    q = t * tile_cols + lax.broadcasted_iota(jnp.int32, (1, tile_cols), 1)
    qf = q.astype(jnp.float32)
    row = jnp.floor((qf + 0.5) * (1.0 / wp))
    ow = qf - row * wp                                     # exact q mod Wp
    valid = (ow < wout) & (q < l_full)
    return valid.astype(jnp.float32)


def _make_fused_kernel(*, n, kh, kw, wp, wout, hout, tile_cols, num_tiles,
                       window, l_full):
    """Single-call kernel: phase 0 = conv + stats (cache y), phase 1 = BN + act."""
    inv_count = 1.0 / float(n * hout * wout)

    def kernel(x_ref, w_ref, gamma_ref, beta_ref, o_ref,
               y_cache, sum_ref, sumsq_ref, scale_ref, shift_ref):
        p = pl.program_id(0)      # phase: 0 = conv + stats, 1 = normalize + act
        i = pl.program_id(1)      # image
        t = pl.program_id(2)      # column tile
        slot = i * num_tiles + t

        @pl.when(p == 0)
        def _conv_and_stats():
            @pl.when((i == 0) & (t == 0))
            def _init():
                sum_ref[...] = jnp.zeros_like(sum_ref)
                sumsq_ref[...] = jnp.zeros_like(sumsq_ref)

            y = _conv_tile(x_ref, w_ref, t, kh=kh, kw=kw, wp=wp,
                           tile_cols=tile_cols, window=window)   # (Oup, TL) f32
            y_cache[slot] = y
            m = _valid_mask(t, tile_cols=tile_cols, wp=wp, wout=wout,
                            l_full=l_full)                       # (1, TL)
            ym = y * m
            # TODO(synk): switch to a centered (Chan et al.) combine for very
            # large N*H*W to avoid E[x^2] - mean^2 cancellation.
            sum_ref[...] += jnp.sum(ym, axis=1, keepdims=True)
            sumsq_ref[...] += jnp.sum(ym * y, axis=1, keepdims=True)

        @pl.when(p == 1)
        def _bn_act():
            @pl.when((i == 0) & (t == 0))
            def _finalize_stats():
                mean = sum_ref[...] * inv_count
                ex2 = sumsq_ref[...] * inv_count
                var = jnp.maximum(ex2 - mean * mean, 0.0)
                inv_std = lax.rsqrt(var + BN_EPS)
                g = gamma_ref[...]
                scale_ref[...] = g * inv_std
                shift_ref[...] = beta_ref[...] - g * inv_std * mean

            z = y_cache[slot] * scale_ref[...] + shift_ref[...]
            o_ref[0] = jnp.where(z > 0, z, LEAKY_SLOPE * z)

    return kernel


def _make_stats_kernel(*, kh, kw, wp, wout, tile_cols, window, l_full):
    """Fallback pass 1: conv + masked per-image sum / sum-of-squares."""
    def kernel(x_ref, w_ref, sum_ref, sumsq_ref):
        t = pl.program_id(1)

        @pl.when(t == 0)
        def _init():
            sum_ref[...] = jnp.zeros_like(sum_ref)
            sumsq_ref[...] = jnp.zeros_like(sumsq_ref)

        y = _conv_tile(x_ref, w_ref, t, kh=kh, kw=kw, wp=wp,
                       tile_cols=tile_cols, window=window)       # (Oup, TL) f32
        m = _valid_mask(t, tile_cols=tile_cols, wp=wp, wout=wout, l_full=l_full)
        ym = y * m
        sum_ref[0] += jnp.sum(ym, axis=1, keepdims=True)
        sumsq_ref[0] += jnp.sum(ym * y, axis=1, keepdims=True)
    return kernel


def _make_apply_kernel(*, kh, kw, wp, tile_cols, window):
    """Fallback pass 2: conv (recomputed) + BN affine + LeakyReLU."""
    def kernel(x_ref, w_ref, scale_ref, shift_ref, o_ref):
        t = pl.program_id(1)
        y = _conv_tile(x_ref, w_ref, t, kh=kh, kw=kw, wp=wp,
                       tile_cols=tile_cols, window=window)
        z = y * scale_ref[...] + shift_ref[...]
        o_ref[0] = jnp.where(z > 0, z, LEAKY_SLOPE * z)
    return kernel


@functools.partial(
    jax.jit,
    static_argnames=("kernel_size", "stride", "pad", "tile_cols",
                     "compute_dtype", "force_two_pass"))
def conv_bn_block(x, weight, gamma, beta, *, kernel_size, stride, pad,
                  tile_cols=None, compute_dtype=jnp.float32,
                  force_two_pass=False):
    """ConvBnBlock forward.  x: (N,C,H,W) f32, weight: (Oup,C,kh,kw) f32.

    Returns (N, Oup, Hout, Wout) f32 in NCHW, matching
    Conv2d(bias=False) -> BatchNorm2d(training batch stats) -> LeakyReLU(0.1).
    """
    assert stride == 1, "fused flattened-shift im2col implemented for stride=1"
    # TODO(synk): generalize the flattened-shift im2col to stride > 1 (needs
    # strided lane slices); not required for this module configuration.

    n, c, h, w = x.shape
    oup = weight.shape[0]
    kh = kw = kernel_size
    hp, wp = h + 2 * pad, w + 2 * pad
    hout = (h + 2 * pad - kh) // stride + 1
    wout = (w + 2 * pad - kw) // stride + 1

    # Flattened-padded output columns per image (q = oh*Wp + ow).
    l_full = hout * wp
    if tile_cols is None:
        tile_cols = _round_up(l_full, 128)       # one lane-dense tile per image
    tile_cols = _round_up(min(tile_cols, _round_up(l_full, 128)), 128)
    num_tiles = pl.cdiv(l_full, tile_cols)
    l_padded = num_tiles * tile_cols
    halo = (kh - 1) * wp + (kw - 1)              # max stencil-tap lane offset
    window = tile_cols + _round_up(max(halo, 1), 128)
    lin_needed = max(hp * wp, (num_tiles - 1) * tile_cols + window)

    # --- single-pass XLA prep: cast to compute_dtype first, then ONE pad that
    # folds the spatial padding AND the flat tail padding into extra zero rows
    # (no im2col, no second pad pass over x in HBM) ---
    extra = max(lin_needed - hp * wp, 0)
    extra_rows = -(-extra // wp)
    lin = (hp + extra_rows) * wp
    xp = jnp.pad(x.astype(compute_dtype),
                 ((0, 0), (0, 0), (pad, pad + extra_rows), (pad, pad)))
    xflat = xp.reshape(n, c, lin)

    # One (Oup, kh*kw*C) weight slab, tap-major / channel-minor rows (matches
    # the in-kernel im2col slab row order).
    kdim = kh * kw * c
    wflat = weight.transpose(0, 2, 3, 1).reshape(oup, kdim).astype(compute_dtype)
    gamma2 = gamma.astype(jnp.float32).reshape(oup, 1)
    beta2 = beta.astype(jnp.float32).reshape(oup, 1)

    # --- VMEM budgeting / fused-vs-fallback decision ---
    itemsize = jnp.dtype(compute_dtype).itemsize
    x_blk = c * lin * itemsize
    w_bytes = oup * kdim * itemsize
    out_blk = oup * tile_cols * 4
    small_scratch = 6 * 8 * 128 * 4                        # padded (Oup,1) scratches
    y_cache_bytes = n * num_tiles * oup * tile_cols * 4
    fused_need = 2 * x_blk + w_bytes + 2 * out_blk + y_cache_bytes + small_scratch
    twopass_need = 2 * x_blk + w_bytes + 2 * out_blk + small_scratch
    # TODO(synk): for planes where even the (1, C, Lin) input block blows VMEM
    # (large H*W*C on v7x's 64 MiB / v5e's 16 MiB scoped default), switch the
    # input to memory_space=pl.ANY with a manually DMA'd overlapping halo window.
    use_fused = (not force_two_pass) and fused_need <= (20 << 20)

    def _vmem_limit(need):
        return int(min(max(4 * need, 32 << 20), 64 << 20))

    x_bytes = n * x_blk
    out_bytes = n * oup * l_padded * 4
    conv_flops = 2 * n * oup * kdim * l_padded

    if use_fused:
        grid = (2, n, num_tiles)                 # (phase, image, column tile)
        z = pl.pallas_call(
            _make_fused_kernel(n=n, kh=kh, kw=kw, wp=wp, wout=wout, hout=hout,
                               tile_cols=tile_cols, num_tiles=num_tiles,
                               window=window, l_full=l_full),
            grid=grid,
            in_specs=[
                # Phase 1 never touches x: park it on block 0 so only the
                # phase-0 sweep pays the input DMAs.
                pl.BlockSpec((1, c, lin), lambda p, i, t: ((1 - p) * i, 0, 0)),
                pl.BlockSpec((oup, kdim), lambda p, i, t: (0, 0)),
                pl.BlockSpec((oup, 1), lambda p, i, t: (0, 0)),
                pl.BlockSpec((oup, 1), lambda p, i, t: (0, 0)),
            ],
            # Phase 0 never writes the output: park it on block (0,0,0) so the
            # only writebacks are the phase-1 tiles (each written exactly once,
            # lane-dense / unmasked stores).
            out_specs=pl.BlockSpec((1, oup, tile_cols),
                                   lambda p, i, t: (p * i, 0, p * t)),
            out_shape=jax.ShapeDtypeStruct((n, oup, l_padded), jnp.float32),
            scratch_shapes=[
                pltpu.VMEM((n * num_tiles, oup, tile_cols), jnp.float32),  # y cache
                pltpu.VMEM((oup, 1), jnp.float32),   # sum
                pltpu.VMEM((oup, 1), jnp.float32),   # sumsq
                pltpu.VMEM((oup, 1), jnp.float32),   # scale
                pltpu.VMEM((oup, 1), jnp.float32),   # shift
            ],
            compiler_params=pltpu.CompilerParams(
                # Stats + cached activations carry across every grid axis.
                # TODO(synk): v7x megacore split of the stats sweep (per-core
                # partial sums combined in an epilogue) for small batch.
                dimension_semantics=("arbitrary", "arbitrary", "arbitrary"),
                vmem_limit_bytes=_vmem_limit(fused_need)),
            cost_estimate=pl.CostEstimate(
                flops=conv_flops + 8 * n * oup * l_padded,
                transcendentals=oup,
                bytes_accessed=x_bytes + w_bytes + out_bytes + 8 * oup),
        )(xflat, wflat, gamma2, beta2)
    else:
        grid = (n, num_tiles)
        # ---- fallback pass 1: conv + per-image BN sum / sum-of-squares ----
        sums, sumsqs = pl.pallas_call(
            _make_stats_kernel(kh=kh, kw=kw, wp=wp, wout=wout,
                               tile_cols=tile_cols, window=window,
                               l_full=l_full),
            grid=grid,
            in_specs=[
                pl.BlockSpec((1, c, lin), lambda i, t: (i, 0, 0)),
                pl.BlockSpec((oup, kdim), lambda i, t: (0, 0)),
            ],
            out_specs=[
                pl.BlockSpec((1, oup, 1), lambda i, t: (i, 0, 0)),
                pl.BlockSpec((1, oup, 1), lambda i, t: (i, 0, 0)),
            ],
            out_shape=[
                jax.ShapeDtypeStruct((n, oup, 1), jnp.float32),
                jax.ShapeDtypeStruct((n, oup, 1), jnp.float32),
            ],
            compiler_params=pltpu.CompilerParams(
                dimension_semantics=("parallel", "arbitrary"),
                vmem_limit_bytes=_vmem_limit(twopass_need)),
            cost_estimate=pl.CostEstimate(
                flops=conv_flops + 4 * n * oup * l_padded,
                transcendentals=0,
                bytes_accessed=x_bytes + w_bytes + 8 * n * oup),
        )(xflat, wflat)

        # BN batch statistics over (N, Hout, Wout); biased variance (training).
        count = jnp.float32(n * hout * wout)
        mean = jnp.sum(sums[:, :, 0], axis=0) / count
        ex2 = jnp.sum(sumsqs[:, :, 0], axis=0) / count
        var = jnp.maximum(ex2 - mean * mean, 0.0)
        inv_std = lax.rsqrt(var + BN_EPS)
        scale = (gamma * inv_std).astype(jnp.float32).reshape(oup, 1)
        shift = (beta - gamma * inv_std * mean).astype(jnp.float32).reshape(oup, 1)

        # ---- fallback pass 2: conv recomputed + BN affine + LeakyReLU ----
        z = pl.pallas_call(
            _make_apply_kernel(kh=kh, kw=kw, wp=wp, tile_cols=tile_cols,
                               window=window),
            grid=grid,
            in_specs=[
                pl.BlockSpec((1, c, lin), lambda i, t: (i, 0, 0)),
                pl.BlockSpec((oup, kdim), lambda i, t: (0, 0)),
                pl.BlockSpec((oup, 1), lambda i, t: (0, 0)),
                pl.BlockSpec((oup, 1), lambda i, t: (0, 0)),
            ],
            out_specs=pl.BlockSpec((1, oup, tile_cols), lambda i, t: (i, 0, t)),
            out_shape=jax.ShapeDtypeStruct((n, oup, l_padded), jnp.float32),
            compiler_params=pltpu.CompilerParams(
                dimension_semantics=("parallel", "parallel"),
                vmem_limit_bytes=_vmem_limit(twopass_need)),
            cost_estimate=pl.CostEstimate(
                flops=conv_flops + 4 * n * oup * l_padded,
                transcendentals=0,
                bytes_accessed=x_bytes + w_bytes + out_bytes + 8 * oup),
        )(xflat, wflat, scale, shift)

    # Drop junk / padded columns; NCHW via a free reshape + one cheap slice.
    out = z[:, :, :l_full].reshape(n, oup, hout, wp)[:, :, :, :wout]
    return out


def _reference(x, weight, gamma, beta, *, stride, pad):
    y = lax.conv_general_dilated(
        x, weight, window_strides=(stride, stride),
        padding=[(pad, pad), (pad, pad)],
        dimension_numbers=("NCHW", "OIHW", "NCHW"))
    mean = y.mean(axis=(0, 2, 3), keepdims=True)
    var = ((y - mean) ** 2).mean(axis=(0, 2, 3), keepdims=True)
    z = (y - mean) / jnp.sqrt(var + BN_EPS)
    z = z * gamma.reshape(1, -1, 1, 1) + beta.reshape(1, -1, 1, 1)
    return jnp.where(z > 0, z, LEAKY_SLOPE * z)


if __name__ == "__main__":
    # Module config: ConvBnBlock(inp=4, oup=8, enable_bn=True, actv_fn='leaky',
    #                            kernel_size=3, stride=1, pad=1)
    inp, oup, kernel_size, stride = 4, 8, 3, 1
    pad = kernel_size // 2  # truthy pad flag -> kernel_size // 2

    key = jax.random.PRNGKey(0)
    kx, kw_, kg, kb = jax.random.split(key, 4)

    x = jax.random.normal(kx, (2, inp, 16, 16), dtype=jnp.float32)
    # enable_bn=True -> conv has no bias.
    weight = jax.random.normal(kw_, (oup, inp, kernel_size, kernel_size),
                               dtype=jnp.float32) * 0.1
    gamma = 1.0 + 0.1 * jax.random.normal(kg, (oup,), dtype=jnp.float32)
    beta = 0.1 * jax.random.normal(kb, (oup,), dtype=jnp.float32)

    ref = _reference(x, weight, gamma, beta, stride=stride, pad=pad)

    # Fused single-call path, one lane-dense tile per image (default).
    out = conv_bn_block(x, weight, gamma, beta,
                        kernel_size=kernel_size, stride=stride, pad=pad)
    out = jax.block_until_ready(out)
    assert out.shape == ref.shape == (2, oup, 16, 16)
    assert jnp.allclose(out, ref, atol=1e-3, rtol=1e-3), "fused mismatch"

    # Fused path with two column tiles per image (exercises the multi-tile
    # VMEM cache + accumulate-across-tiles path).
    out2 = jax.block_until_ready(
        conv_bn_block(x, weight, gamma, beta, kernel_size=kernel_size,
                      stride=stride, pad=pad, tile_cols=256))
    assert jnp.allclose(out2, ref, atol=1e-3, rtol=1e-3), "multi-tile mismatch"

    # Two-pass fallback (used automatically when the cached conv activation
    # would not fit VMEM).
    out3 = jax.block_until_ready(
        conv_bn_block(x, weight, gamma, beta, kernel_size=kernel_size,
                      stride=stride, pad=pad, force_two_pass=True))
    assert jnp.allclose(out3, ref, atol=1e-3, rtol=1e-3), "fallback mismatch"

    print("KERNEL_OK")
</pallas_src>

<mosaic_0001>
module attributes {stable_mosaic.version = 11 : i64} {
  func.func @kernel(%arg0: i32, %arg1: i32, %arg2: i32, %arg3: memref<1x4x522xf32, #tpu.memory_space<vmem>>, %arg4: memref<8x36xf32, #tpu.memory_space<vmem>>, %arg5: memref<8x1xf32, #tpu.memory_space<vmem>>, %arg6: memref<8x1xf32, #tpu.memory_space<vmem>>, %arg7: memref<1x8x384xf32, #tpu.memory_space<vmem>>, %arg8: memref<2x8x384xf32, #tpu.memory_space<vmem>>, %arg9: memref<8x1xf32, #tpu.memory_space<vmem>>, %arg10: memref<8x1xf32, #tpu.memory_space<vmem>>, %arg11: memref<8x1xf32, #tpu.memory_space<vmem>>, %arg12: memref<8x1xf32, #tpu.memory_space<vmem>>) attributes {dimension_semantics = [#tpu.dimension_semantics<arbitrary>, #tpu.dimension_semantics<arbitrary>, #tpu.dimension_semantics<arbitrary>], iteration_bounds = array<i64: 2, 2, 1>, scalar_prefetch = 0 : i64, scratch_operands = 5 : i64, tpu.core_type = #tpu.core_type<tc>, window_params = [{transform_indices = @transform_0, window_bounds = array<i64: 1, 4, 522>}, {pipeline_mode = #tpu.pipeline_mode<synchronous>, transform_indices = @transform_1, window_bounds = array<i64: 8, 36>}, {pipeline_mode = #tpu.pipeline_mode<synchronous>, transform_indices = @transform_2, window_bounds = array<i64: 8, 1>}, {pipeline_mode = #tpu.pipeline_mode<synchronous>, transform_indices = @transform_3, window_bounds = array<i64: 8, 1>}, {transform_indices = @transform_4, window_bounds = array<i64: 1, 8, 384>}]} {
    %c1_i32 = arith.constant 1 : i32
    %0 = arith.muli %arg1, %c1_i32 : i32
    %1 = arith.addi %0, %arg2 : i32
    %c0_i32 = arith.constant 0 : i32
    %2 = arith.cmpi eq, %arg0, %c0_i32 : i32
    %3 = arith.extui %2 : i1 to i32
    %c0_i32_0 = arith.constant 0 : i32
    %4 = arith.cmpi ne, %3, %c0_i32_0 : i32
    scf.if %4 {
      %c0_i32_3 = arith.constant 0 : i32
      %8 = arith.cmpi eq, %arg1, %c0_i32_3 : i32
      %c0_i32_4 = arith.constant 0 : i32
      %9 = arith.cmpi eq, %arg2, %c0_i32_4 : i32
      %10 = arith.andi %8, %9 : i1
      %11 = arith.extui %10 : i1 to i32
      %c0_i32_5 = arith.constant 0 : i32
      %12 = arith.cmpi ne, %11, %c0_i32_5 : i32
      scf.if %12 {
        %cst_26 = arith.constant 0.000000e+00 : f32
        %67 = vector.broadcast %cst_26 : f32 to vector<8x1xf32>
        %c0_27 = arith.constant 0 : index
        %c0_28 = arith.constant 0 : index
        %68 = vector.load %arg9[%c0_27, %c0_28] : memref<8x1xf32, #tpu.memory_space<vmem>>, vector<8x1xf32>
        tpu.vector_store %arg9[%c0_27, %c0_28], %67 {strides = array<i32>} : memref<8x1xf32, #tpu.memory_space<vmem>>, vector<8x1xf32>,
        %cst_29 = arith.constant 0.000000e+00 : f32
        %69 = vector.broadcast %cst_29 : f32 to vector<8x1xf32>
        %c0_30 = arith.constant 0 : index
        %c0_31 = arith.constant 0 : index
        %70 = vector.load %arg10[%c0_30, %c0_31] : memref<8x1xf32, #tpu.memory_space<vmem>>, vector<8x1xf32>
        tpu.vector_store %arg10[%c0_30, %c0_31], %69 {strides = array<i32>} : memref<8x1xf32, #tpu.memory_space<vmem>>, vector<8x1xf32>,
      } else {
      }
      %c384_i32 = arith.constant 384 : i32
      %13 = arith.muli %arg2, %c384_i32 : i32
      %14 = tpu.assume_multiple %13, 128 : i32
      %c0 = arith.constant 0 : index
      %c0_6 = arith.constant 0 : index
      %15 = arith.index_cast %14 : i32 to index
      %16 = vector.load %arg3[%c0, %c0_6, %15] : memref<1x4x522xf32, #tpu.memory_space<vmem>>, vector<1x4x512xf32>
      %17 = vector.shape_cast %16 : vector<1x4x512xf32> to vector<4x512xf32>
      %18 = vector.extract_strided_slice %17 {offsets = [0, 0], sizes = [4, 384], strides = [1, 1]} : vector<4x512xf32> to vector<4x384xf32>
      %19 = vector.extract_strided_slice %17 {offsets = [0, 1], sizes = [4, 384], strides = [1, 1]} : vector<4x512xf32> to vector<4x384xf32>
      %20 = vector.extract_strided_slice %17 {offsets = [0, 2], sizes = [4, 384], strides = [1, 1]} : vector<4x512xf32> to vector<4x384xf32>
      %21 = vector.extract_strided_slice %17 {offsets = [0, 18], sizes = [4, 384], strides = [1, 1]} : vector<4x512xf32> to vector<4x384xf32>
      %22 = vector.extract_strided_slice %17 {offsets = [0, 19], sizes = [4, 384], strides = [1, 1]} : vector<4x512xf32> to vector<4x384xf32>
      %23 = vector.extract_strided_slice %17 {offsets = [0, 20], sizes = [4, 384], strides = [1, 1]} : vector<4x512xf32> to vector<4x384xf32>
      %24 = vector.extract_strided_slice %17 {offsets = [0, 36], sizes = [4, 384], strides = [1, 1]} : vector<4x512xf32> to vector<4x384xf32>
      %25 = vector.extract_strided_slice %17 {offsets = [0, 37], sizes = [4, 384], strides = [1, 1]} : vector<4x512xf32> to vector<4x384xf32>
      %26 = vector.extract_strided_slice %17 {offsets = [0, 38], sizes = [4, 384], strides = [1, 1]} : vector<4x512xf32> to vector<4x384xf32>
      %27 = tpu.concatenate %18, %19, %20, %21, %22, %23, %24, %25, %26 in 0 : vector<4x384xf32>, vector<4x384xf32>, vector<4x384xf32>, vector<4x384xf32>, vector<4x384xf32>, vector<4x384xf32>, vector<4x384xf32>, vector<4x384xf32>, vector<4x384xf32> -> vector<36x384xf32>
      %c0_7 = arith.constant 0 : index
      %c0_8 = arith.constant 0 : index
      %28 = vector.load %arg4[%c0_7, %c0_8] : memref<8x36xf32, #tpu.memory_space<vmem>>, vector<8x36xf32>
      %cst = arith.constant dense<0.000000e+00> : vector<8x384xf32>
      %29 = tpu.matmul %28, %27, %cst {dimension_numbers = #tpu.dot_dimension_numbers<[1], [0], [0], [1], [0, 0, 1, 1], [], []>} : vector<8x36xf32>, vector<36x384xf32>, vector<8x384xf32> -> vector<8x384xf32>
      %30 = arith.index_cast %1 : i32 to index
      %c0_9 = arith.constant 0 : index
      %c0_10 = arith.constant 0 : index
      %31 = vector.load %arg8[%30, %c0_9, %c0_10] : memref<2x8x384xf32, #tpu.memory_space<vmem>>, vector<1x8x384xf32>
      %32 = vector.shape_cast %31 : vector<1x8x384xf32> to vector<8x384xf32>
      %33 = vector.shape_cast %29 : vector<8x384xf32> to vector<1x8x384xf32>
      tpu.vector_store %arg8[%30, %c0_9, %c0_10], %33 {strides = array<i32>} : memref<2x8x384xf32, #tpu.memory_space<vmem>>, vector<1x8x384xf32>,
      %c384_i32_11 = arith.constant 384 : i32
      %34 = arith.muli %arg2, %c384_i32_11 : i32
      %35 = tpu.iota {dimensions = array<i32: 1>} : vector<1x384xi32>
      %36 = vector.broadcast %34 : i32 to vector<1x384xi32>
      %37 = arith.addi %36, %35 : vector<1x384xi32>
      %38 = arith.sitofp %37 : vector<1x384xi32> to vector<1x384xf32>
      %cst_12 = arith.constant 5.000000e-01 : f32
      %39 = vector.broadcast %cst_12 : f32 to vector<1x384xf32>
      %40 = arith.addf %38, %39 : vector<1x384xf32>
      %cst_13 = arith.constant 0.055555556 : f32
      %41 = vector.broadcast %cst_13 : f32 to vector<1x384xf32>
      %42 = arith.mulf %40, %41 : vector<1x384xf32>
      %43 = math.floor %42 : vector<1x384xf32>
      %cst_14 = arith.constant 1.800000e+01 : f32
      %44 = vector.broadcast %cst_14 : f32 to vector<1x384xf32>
      %45 = arith.mulf %43, %44 : vector<1x384xf32>
      %46 = arith.subf %38, %45 : vector<1x384xf32>
      %cst_15 = arith.constant 1.600000e+01 : f32
      %47 = vector.broadcast %cst_15 : f32 to vector<1x384xf32>
      %48 = arith.cmpf olt, %46, %47 : vector<1x384xf32>
      %c288_i32 = arith.constant 288 : i32
      %49 = vector.broadcast %c288_i32 : i32 to vector<1x384xi32>
      %50 = arith.cmpi slt, %37, %49 : vector<1x384xi32>
      %51 = arith.andi %48, %50 : vector<1x384xi1>
      %52 = arith.extui %51 : vector<1x384xi1> to vector<1x384xi32>
      %53 = arith.sitofp %52 : vector<1x384xi32> to vector<1x384xf32>
      %54 = vector.broadcast %53 : vector<1x384xf32> to vector<8x384xf32>
      %55 = arith.mulf %29, %54 : vector<8x384xf32>
      %c0_16 = arith.constant 0 : index
      %c0_17 = arith.constant 0 : index
      %56 = vector.load %arg9[%c0_16, %c0_17] : memref<8x1xf32, #tpu.memory_space<vmem>>, vector<8x1xf32>
      %cst_18 = arith.constant dense<0.000000e+00> : vector<8xf32>
      %57 = vector.multi_reduction <add>, %55, %cst_18 [1] : vector<8x384xf32> to vector<8xf32>
      %58 = vector.shape_cast %57 : vector<8xf32> to vector<8x1xf32>
      %59 = arith.addf %56, %58 : vector<8x1xf32>
      %c0_19 = arith.constant 0 : index
      %c0_20 = arith.constant 0 : index
      %60 = vector.load %arg9[%c0_19, %c0_20] : memref<8x1xf32, #tpu.memory_space<vmem>>, vector<8x1xf32>
      tpu.vector_store %arg9[%c0_19, %c0_20], %59 {strides = array<i32>} : memref<8x1xf32, #tpu.memory_space<vmem>>, vector<8x1xf32>,
      %c0_21 = arith.constant 0 : index
      %c0_22 = arith.constant 0 : index
      %61 = vector.load %arg10[%c0_21, %c0_22] : memref<8x1xf32, #tpu.memory_space<vmem>>, vector<8x1xf32>
      %62 = arith.mulf %55, %29 : vector<8x384xf32>
      %cst_23 = arith.constant dense<0.000000e+00> : vector<8xf32>
      %63 = vector.multi_reduction <add>, %62, %cst_23 [1] : vector<8x384xf32> to vector<8xf32>
      %64 = vector.shape_cast %63 : vector<8xf32> to vector<8x1xf32>
      %65 = arith.addf %61, %64 : vector<8x1xf32>
      %c0_24 = arith.constant 0 : index
      %c0_25 = arith.constant 0 : index
      %66 = vector.load %arg10[%c0_24, %c0_25] : memref<8x1xf32, #tpu.memory_space<vmem>>, vector<8x1xf32>
      tpu.vector_store %arg10[%c0_24, %c0_25], %65 {strides = array<i32>} : memref<8x1xf32, #tpu.memory_space<vmem>>, vector<8x1xf32>,
    } else {
    }
    %c1_i32_1 = arith.constant 1 : i32
    %5 = arith.cmpi eq, %arg0, %c1_i32_1 : i32
    %6 = arith.extui %5 : i1 to i32
    %c0_i32_2 = arith.constant 0 : i32
    %7 = arith.cmpi ne, %6, %c0_i32_2 : i32
    scf.if %7 {
      %c0_i32_3 = arith.constant 0 : i32
      %8 = arith.cmpi eq, %arg1, %c0_i32_3 : i32
      %c0_i32_4 = arith.constant 0 : i32
      %9 = arith.cmpi eq, %arg2, %c0_i32_4 : i32
      %10 = arith.andi %8, %9 : i1
      %11 = arith.extui %10 : i1 to i32
      %c0_i32_5 = arith.constant 0 : i32
      %12 = arith.cmpi ne, %11, %c0_i32_5 : i32
      scf.if %12 {
        %c0_15 = arith.constant 0 : index
        %c0_16 = arith.constant 0 : index
        %30 = vector.load %arg9[%c0_15, %c0_16] : memref<8x1xf32, #tpu.memory_space<vmem>>, vector<8x1xf32>
        %cst_17 = arith.constant 0.001953125 : f32
        %31 = vector.broadcast %cst_17 : f32 to vector<8x1xf32>
        %32 = arith.mulf %30, %31 : vector<8x1xf32>
        %c0_18 = arith.constant 0 : index
        %c0_19 = arith.constant 0 : index
        %33 = vector.load %arg10[%c0_18, %c0_19] : memref<8x1xf32, #tpu.memory_space<vmem>>, vector<8x1xf32>
        %cst_20 = arith.constant 0.001953125 : f32
        %34 = vector.broadcast %cst_20 : f32 to vector<8x1xf32>
        %35 = arith.mulf %33, %34 : vector<8x1xf32>
        %36 = arith.mulf %32, %32 : vector<8x1xf32>
        %37 = arith.subf %35, %36 : vector<8x1xf32>
        %cst_21 = arith.constant 0.000000e+00 : f32
        %38 = vector.broadcast %cst_21 : f32 to vector<8x1xf32>
        %39 = arith.maximumf %37, %38 : vector<8x1xf32>
        %cst_22 = arith.constant 9.99999974E-6 : f32
        %40 = vector.broadcast %cst_22 : f32 to vector<8x1xf32>
        %41 = arith.addf %39, %40 : vector<8x1xf32>
        %42 = math.rsqrt %41 : vector<8x1xf32>
        %c0_23 = arith.constant 0 : index
        %c0_24 = arith.constant 0 : index
        %43 = vector.load %arg5[%c0_23, %c0_24] : memref<8x1xf32, #tpu.memory_space<vmem>>, vector<8x1xf32>
        %44 = arith.mulf %43, %42 : vector<8x1xf32>
        %c0_25 = arith.constant 0 : index
        %c0_26 = arith.constant 0 : index
        %45 = vector.load %arg11[%c0_25, %c0_26] : memref<8x1xf32, #tpu.memory_space<vmem>>, vector<8x1xf32>
        tpu.vector_store %arg11[%c0_25, %c0_26], %44 {strides = array<i32>} : memref<8x1xf32, #tpu.memory_space<vmem>>, vector<8x1xf32>,
        %c0_27 = arith.constant 0 : index
        %c0_28 = arith.constant 0 : index
        %46 = vector.load %arg6[%c0_27, %c0_28] : memref<8x1xf32, #tpu.memory_space<vmem>>, vector<8x1xf32>
        %47 = arith.mulf %43, %42 : vector<8x1xf32>
        %48 = arith.mulf %47, %32 : vector<8x1xf32>
        %49 = arith.subf %46, %48 : vector<8x1xf32>
        %c0_29 = arith.constant 0 : index
        %c0_30 = arith.constant 0 : index
        %50 = vector.load %arg12[%c0_29, %c0_30] : memref<8x1xf32, #tpu.memory_space<vmem>>, vector<8x1xf32>
        tpu.vector_store %arg12[%c0_29, %c0_30], %49 {strides = array<i32>} : memref<8x1xf32, #tpu.memory_space<vmem>>, vector<8x1xf32>,
      } else {
      }
      %13 = arith.index_cast %1 : i32 to index
      %c0 = arith.constant 0 : index
      %c0_6 = arith.constant 0 : index
      %14 = vector.load %arg8[%13, %c0, %c0_6] : memref<2x8x384xf32, #tpu.memory_space<vmem>>, vector<1x8x384xf32>
      %15 = vector.shape_cast %14 : vector<1x8x384xf32> to vector<8x384xf32>
      %c0_7 = arith.constant 0 : index
      %c0_8 = arith.constant 0 : index
      %16 = vector.load %arg11[%c0_7, %c0_8] : memref<8x1xf32, #tpu.memory_space<vmem>>, vector<8x1xf32>
      %17 = vector.broadcast %16 : vector<8x1xf32> to vector<8x384xf32>
      %18 = arith.mulf %15, %17 : vector<8x384xf32>
      %c0_9 = arith.constant 0 : index
      %c0_10 = arith.constant 0 : index
      %19 = vector.load %arg12[%c0_9, %c0_10] : memref<8x1xf32, #tpu.memory_space<vmem>>, vector<8x1xf32>
      %20 = vector.broadcast %19 : vector<8x1xf32> to vector<8x384xf32>
      %21 = arith.addf %18, %20 : vector<8x384xf32>
      %cst = arith.constant 0.000000e+00 : f32
      %22 = vector.broadcast %cst : f32 to vector<8x384xf32>
      %23 = arith.cmpf ogt, %21, %22 : vector<8x384xf32>
      %cst_11 = arith.constant 1.000000e-01 : f32
      %24 = vector.broadcast %cst_11 : f32 to vector<8x384xf32>
      %25 = arith.mulf %24, %21 : vector<8x384xf32>
      %26 = arith.select %23, %21, %25 : vector<8x384xi1>, vector<8x384xf32>
      %c0_12 = arith.constant 0 : index
      %c0_13 = arith.constant 0 : index
      %c0_14 = arith.constant 0 : index
      %27 = vector.load %arg7[%c0_12, %c0_13, %c0_14] : memref<1x8x384xf32, #tpu.memory_space<vmem>>, vector<1x8x384xf32>
      %28 = vector.shape_cast %27 : vector<1x8x384xf32> to vector<8x384xf32>
      %29 = vector.shape_cast %26 : vector<8x384xf32> to vector<1x8x384xf32>
      tpu.vector_store %arg7[%c0_12, %c0_13, %c0_14], %29 {strides = array<i32>} : memref<1x8x384xf32, #tpu.memory_space<vmem>>, vector<1x8x384xf32>,
    } else {
    }
    return
  }
  func.func @transform_0(%arg0: i32, %arg1: i32, %arg2: i32) -> (i32, i32, i32) {
    %c1_i32 = arith.constant 1 : i32
    %0 = arith.subi %c1_i32, %arg0 : i32
    %1 = arith.muli %0, %arg1 : i32
    %c0_i32 = arith.constant 0 : i32
    %c0_i32_0 = arith.constant 0 : i32
    %c0_i32_1 = arith.constant 0 : i32
    return %1, %c0_i32, %c0_i32_0 : i32, i32, i32
  }
  func.func @transform_1(%arg0: i32, %arg1: i32, %arg2: i32) -> (i32, i32) {
    %c0_i32 = arith.constant 0 : i32
    %c0_i32_0 = arith.constant 0 : i32
    %c0_i32_1 = arith.constant 0 : i32
    return %c0_i32, %c0_i32_0 : i32, i32
  }
  func.func @transform_2(%arg0: i32, %arg1: i32, %arg2: i32) -> (i32, i32) {
    %c0_i32 = arith.constant 0 : i32
    %c0_i32_0 = arith.constant 0 : i32
    %c0_i32_1 = arith.constant 0 : i32
    return %c0_i32, %c0_i32_0 : i32, i32
  }
  func.func @transform_3(%arg0: i32, %arg1: i32, %arg2: i32) -> (i32, i32) {
    %c0_i32 = arith.constant 0 : i32
    %c0_i32_0 = arith.constant 0 : i32
    %c0_i32_1 = arith.constant 0 : i32
    return %c0_i32, %c0_i32_0 : i32, i32
  }
  func.func @transform_4(%arg0: i32, %arg1: i32, %arg2: i32) -> (i32, i32, i32) {
    %0 = arith.muli %arg0, %arg1 : i32
    %1 = arith.muli %arg0, %arg2 : i32
    %c0_i32 = arith.constant 0 : i32
    %c0_i32_0 = arith.constant 0 : i32
    return %0, %c0_i32, %1 : i32, i32, i32
  }
}

</mosaic_0001>

<llo_original>
// kernel: conv_bn_block.1
$region0: #{conv_bn_block.1}
  #allocation0 [shape = 'u32[]', space=smem, size = 0x4, offset = 0x4, fixed_abs, tag = 'smem constant byte address 0x4 - core index']
  #allocation1 [shape = 'u32[144,128]{1,0:T(1,128)}', space=vmem, size = 0x12000, scoped, tag = 'internal scratch']
  #allocation2 [shape = 'f32[2,8,384]{2,1,0:T(8,128)}', space=vmem, size = 0x6000, scoped, tag = 'scratch operand']
  #allocation3 [shape = 'f32[8,1]{1,0:T(8,128)}', space=vmem, size = 0x1000, scoped, tag = 'scratch operand']
  #allocation4 [shape = 'f32[8,1]{1,0:T(8,128)}', space=vmem, size = 0x1000, scoped, tag = 'scratch operand']
  #allocation5 [shape = 'f32[8,1]{1,0:T(8,128)}', space=vmem, size = 0x1000, scoped, tag = 'scratch operand']
  #allocation6 [shape = 'f32[8,1]{1,0:T(8,128)}', space=vmem, size = 0x1000, scoped, tag = 'scratch operand']
  %s0 = inlined_call_operand.vmem [shape: f32[2,4,522], index: 0, kind: input, shape index: {}]
  %s1 = inlined_call_operand.vmem [shape: f32[8,36], index: 1, kind: input, shape index: {}]
  %s2 = inlined_call_operand.vmem [shape: f32[8,1], index: 2, kind: input, shape index: {}]
  %s3 = inlined_call_operand.vmem [shape: f32[8,1], index: 3, kind: input, shape index: {}]
  %s4 = inlined_call_operand.vmem [shape: f32[2,8,384], index: 4, kind: output, shape index: {}]
  %s5 = sld [smem:[#allocation0]]
  $region65: #{conv_bn_block.1} parent=0
    _
  %s7 = ssub.s32 1, %s5
  %s8 = scalar_select 0, %s7, %s5
  loop: start=0, step=1, limit=6
  $region2: #{conv_bn_block.1} parent=0 // loop_pre_header
    _
  $region3: #{conv_bn_block.1} parent=0 // loop_header
    %s10 = sphi 0, %s14
    %p11 = scmp.ge.s32.totalorder %s10, 6
    %s17 = sphi 0, %s36
    %s18 = sphi 0, %s32
    %s19 = sphi 0, %s28
    %s20 = sphi 0, %s17
    %s21 = sphi 0, %s18
    %s22 = sphi 0, %s19
    %s23 = sphi 0, %s20
    %s24 = sphi 0, %s21
    %s25 = sphi 0, %s22
    %s43 = sphi 0, %s45
    %s46 = sphi 0, %s43
    %s47 = sphi 0, %s46
    %s63 = sphi 0, %s47
    %s67 = sphi 0, %s67
    %s69 = sphi 0, %s67
    %s70 = sphi 0, %s69
    %s84 = sphi 0, %s70
    %s88 = sphi 0, %s88
    %s90 = sphi 0, %s88
    %s91 = sphi 0, %s90
    %s105 = sphi 0, %s91
    %s109 = sphi 0, %s109
    %s111 = sphi 0, %s109
    %s112 = sphi 0, %s111
    %s126 = sphi 0, %s112
    %s138 = sphi 0, %s140
    %s141 = sphi 0, %s138
    %s142 = sphi 0, %s141
    %s158 = sphi 0, %s142
  $region4: #{conv_bn_block.1} parent=0 // loop_header_branch
    %13 = sbr.rel (%p11) target = $region8
  $region5: #{conv_bn_block.1} parent=0 // loop_body
    %s15 = ssub.s32 %s10, 1
    %s16 = ssub.s32 %s10, 2
    %s26 = sadd.s32 1, %s19
    %p27 = scmp.ge.s32.totalorder %s26, 1
    %s28 = scalar_select %p27, 0, %s26
    %s29 = sadd.s32 1, %s18
    %s30 = scalar_select %p27, %s29, %s18
    %p31 = scmp.ge.s32.totalorder %s30, 2
    %s32 = scalar_select %p31, 0, %s30
    %s33 = sadd.s32 1, %s17
    %s34 = scalar_select %p31, %s33, %s17
    %p35 = scmp.ge.s32.totalorder %s34, 2
    %s36 = scalar_select %p35, 0, %s34
    %s37 = ssub.s32 1, %s17
    %s38 = smul.u32 %s37, %s18
    %s39 = ssub.s32 1, %s36
    %s40 = smul.u32 %s39, %s32
    %s41 = ssub.s32 %s38, %s40
    %p42 = scmp.eq.s32.totalorder %s41, 0
    %s44 = sadd.s32 %s43, 1
    %s45 = scalar_select %p42, %s43, %s44
    %p48 = pneg %p42
    %p49 = scmp.eq.s32.totalorder %s10, 3
    %p50 = por %p48, %p49
    %p51 = scmp.ne.s32.totalorder %s43, %s46
    %p52 = scmp.eq.s32.totalorder %s10, 0
    %p53 = por %p51, %p52
    %p54 = scmp.ne.s32.totalorder %s43, %s46
    %p55 = scmp.eq.s32.totalorder %s15, 3
    %p56 = por %p54, %p55
    %p57 = scmp.ne.s32.totalorder %s46, %s47
    %p58 = scmp.eq.s32.totalorder %s15, 0
    %p59 = por %p57, %p58
    %p60 = scmp.ne.s32.totalorder %s46, %s47
    %p61 = scmp.eq.s32.totalorder %s16, 3
    %p62 = por %p60, %p61
    %p64 = scmp.ne.s32.totalorder %s47, %s63
    %p65 = scmp.eq.s32.totalorder %s16, 0
    %p66 = por %p64, %p65
    %s68 = sadd.s32 %s67, 1
    %p71 = scmp.eq.s32.totalorder %s10, 3
    %p72 = scmp.ne.s32.totalorder %s67, %s69
    %p73 = scmp.eq.s32.totalorder %s10, 0
    %p74 = por %p72, %p73
    %p75 = scmp.ne.s32.totalorder %s67, %s69
    %p76 = scmp.eq.s32.totalorder %s15, 3
    %p77 = por %p75, %p76
    %p78 = scmp.ne.s32.totalorder %s69, %s70
    %p79 = scmp.eq.s32.totalorder %s15, 0
    %p80 = por %p78, %p79
    %p81 = scmp.ne.s32.totalorder %s69, %s70
    %p82 = scmp.eq.s32.totalorder %s16, 3
    %p83 = por %p81, %p82
    %p85 = scmp.ne.s32.totalorder %s70, %s84
    %p86 = scmp.eq.s32.totalorder %s16, 0
    %p87 = por %p85, %p86
    %s89 = sadd.s32 %s88, 1
    %p92 = scmp.eq.s32.totalorder %s10, 3
    %p93 = scmp.ne.s32.totalorder %s88, %s90
    %p94 = scmp.eq.s32.totalorder %s10, 0
    %p95 = por %p93, %p94
    %p96 = scmp.ne.s32.totalorder %s88, %s90
    %p97 = scmp.eq.s32.totalorder %s15, 3
    %p98 = por %p96, %p97
    %p99 = scmp.ne.s32.totalorder %s90, %s91
    %p100 = scmp.eq.s32.totalorder %s15, 0
    %p101 = por %p99, %p100
    %p102 = scmp.ne.s32.totalorder %s90, %s91
    %p103 = scmp.eq.s32.totalorder %s16, 3
    %p104 = por %p102, %p103
    %p106 = scmp.ne.s32.totalorder %s91, %s105
    %p107 = scmp.eq.s32.totalorder %s16, 0
    %p108 = por %p106, %p107
    %s110 = sadd.s32 %s109, 1
    %p113 = scmp.eq.s32.totalorder %s10, 3
    %p114 = scmp.ne.s32.totalorder %s109, %s111
    %p115 = scmp.eq.s32.totalorder %s10, 0
    %p116 = por %p114, %p115
    %p117 = scmp.ne.s32.totalorder %s109, %s111
    %p118 = scmp.eq.s32.totalorder %s15, 3
    %p119 = por %p117, %p118
    %p120 = scmp.ne.s32.totalorder %s111, %s112
    %p121 = scmp.eq.s32.totalorder %s15, 0
    %p122 = por %p120, %p121
    %p123 = scmp.ne.s32.totalorder %s111, %s112
    %p124 = scmp.eq.s32.totalorder %s16, 3
    %p125 = por %p123, %p124
    %p127 = scmp.ne.s32.totalorder %s112, %s126
    %p128 = scmp.eq.s32.totalorder %s16, 0
    %p129 = por %p127, %p128
    %s130 = smul.u32 %s17, %s18
    %s131 = smul.u32 %s17, %s19
    %s132 = smul.u32 %s36, %s32
    %s133 = smul.u32 %s36, %s28
    %s134 = ssub.s32 %s130, %s132
    %s135 = ssub.s32 %s131, %s133
    %s136 = sor.u32 %s134, %s135
    %p137 = scmp.eq.s32.totalorder %s136, 0
    %s139 = sadd.s32 %s138, 1
    %s140 = scalar_select %p137, %s138, %s139
    %p143 = pneg %p137
    %p144 = scmp.eq.s32.totalorder %s10, 3
    %p145 = por %p143, %p144
    %p146 = scmp.ne.s32.totalorder %s138, %s141
    %p147 = scmp.eq.s32.totalorder %s10, 0
    %p148 = por %p146, %p147
    %p149 = scmp.ne.s32.totalorder %s138, %s141
    %p150 = scmp.eq.s32.totalorder %s15, 3
    %p151 = por %p149, %p150
    %p152 = scmp.ne.s32.totalorder %s141, %s142
    %p153 = scmp.eq.s32.totalorder %s15, 0
    %p154 = por %p152, %p153
    %p155 = scmp.ne.s32.totalorder %s141, %s142
    %p156 = scmp.eq.s32.totalorder %s16, 3
    %p157 = por %p155, %p156
    %p159 = scmp.ne.s32.totalorder %s142, %s158
    %p160 = scmp.eq.s32.totalorder %s16, 0
    %p161 = por %p159, %p160
    %p162 = scmp.le.s32.totalorder 1, %s10
    %p163 = scmp.lt.s32.totalorder %s10, 5
    %p164 = pnand %p162, %p163
    %p165 = pneg %p164
    // Predicated region
    $region9: #{conv_bn_block.1} parent=5 // pred_check
      _
    $region10: #{conv_bn_block.1} parent=5 // pred_check_branch
      %167 = sbr.rel (%p164) target = $region12
    $region11: #{conv_bn_block.1} parent=5 // pred_region
      %s168 = ssub.s32 %s10, 1
      // Predicated region
      $region13: #{conv_bn_block.1} parent=11 // pred_check
        %p169 = pneg %p80
      $region14: #{conv_bn_block.1} parent=11 // pred_check_branch
        %171 = sbr.rel (%p169) target = $region16
      $region15: #{conv_bn_block.1} parent=11 // pred_region
        _
      $region16: #{conv_bn_block.1} parent=11 // pred_fallthru
        _
      // Predicated region
      $region17: #{conv_bn_block.1} parent=11 // pred_check
        %p172 = pneg %p101
      $region18: #{conv_bn_block.1} parent=11 // pred_check_branch
        %174 = sbr.rel (%p172) target = $region20
      $region19: #{conv_bn_block.1} parent=11 // pred_region
        _
      $region20: #{conv_bn_block.1} parent=11 // pred_fallthru
        _
      // Predicated region
      $region21: #{conv_bn_block.1} parent=11 // pred_check
        %p175 = pneg %p122
      $region22: #{conv_bn_block.1} parent=11 // pred_check_branch
        %177 = sbr.rel (%p175) target = $region24
      $region23: #{conv_bn_block.1} parent=11 // pred_region
        _
      $region24: #{conv_bn_block.1} parent=11 // pred_fallthru
        _
    $region12: #{conv_bn_block.1} parent=5 // pred_fallthru
      _
    %p178 = scmp.lt.s32.totalorder %s10, 4
    // Predicated region
    $region25: #{conv_bn_block.1} parent=5 // pred_check
      %p179 = pneg %p178
    $region26: #{conv_bn_block.1} parent=5 // pred_check_branch
      %181 = sbr.rel (%p179) target = $region28
    $region27: #{conv_bn_block.1} parent=5 // pred_region
      // Predicated region
      $region29: #{conv_bn_block.1} parent=27 // pred_check
        %p182 = pneg %p53
      $region30: #{conv_bn_block.1} parent=27 // pred_check_branch
        %184 = sbr.rel (%p182) target = $region32
      $region31: #{conv_bn_block.1} parent=27 // pred_region
        %s185 = ssub.s32 1, %s17
        %s186 = smul.u32 %s185, %s18
        %p187 = scmp.lt.s32.totalorder %s186, 1
        %s188 = scalar_select %p187, %s186, 1
        %s189 = smul.addr %s188, 5
        %s190 = smul.addr %s189, 4
        %s191 = scalar_lea.vmem %s0, %s190
        %s192 = ssub.s32 1, %s17
        %s193 = smul.u32 %s192, %s18
      $region32: #{conv_bn_block.1} parent=27 // pred_fallthru
        _
    $region28: #{conv_bn_block.1} parent=5 // pred_fallthru
      _
    %p194 = scmp.le.s32.totalorder 1, %s10
    %p195 = scmp.lt.s32.totalorder %s10, 5
    %p196 = pnand %p194, %p195
    %p197 = pneg %p196
    // Predicated region
    $region33: #{conv_bn_block.1} parent=5 // pred_check
      _
    $region34: #{conv_bn_block.1} parent=5 // pred_check_branch
      %199 = sbr.rel (%p196) target = $region36
    $region35: #{conv_bn_block.1} parent=5 // pred_region
      %s200 = ssub.s32 %s10, 1
      %s201 = ssub.s32 1, %s20
      %s202 = smul.u32 %s201, %s21
      %p203 = scmp.lt.s32.totalorder %s202, 1
      %s204 = scalar_select %p203, %s202, 1
      %s205 = smul.addr %s204, 5
      %s206 = smul.addr %s205, 4
      %s207 = scalar_lea.vmem %s0, %s206
      %p208 = pneg %p59
      %p209 = pneg %p56
      %p210 = pneg %p80
      %p211 = pneg %p77
      %p212 = pneg %p101
      %p213 = pneg %p98
      %p214 = pneg %p122
      %p215 = pneg %p119
      %p216 = pneg %p154
      %p217 = pneg %p151
      %s218 = smul.u32 %s20, %s21
      %s219 = smul.u32 %s20, %s22
      %s220 = smul.u32 3, %s219
      %p221 = scmp.lt.s32.totalorder %s218, 1
      %s222 = scalar_select %p221, %s218, 1
      %p223 = scmp.lt.s32.totalorder %s220, 2
      %s224 = scalar_select %p223, %s220, 2
      %s225 = smul.addr %s222, 3
      %s226 = sadd.s32 %s224, %s225
      %s227 = smul.addr %s226, 8
      %s228 = scalar_lea.vmem %s4, %s227
      %s229 = ssub.s32 1, %s20
      %s230 = smul.u32 %s229, %s21
      %p231 = scmp.lt.s32.totalorder %s230, 1
      %s232 = scalar_select %p231, %s230, 1
      %s233 = smul.addr %s232, 5
      %s234 = smul.addr %s233, 4
      %s235 = scalar_lea.vmem %s0, %s234
      %s236 = ssub.s32 1, %s20
      %s237 = smul.u32 %s236, %s21
      %s238 = smul.u32 %s20, %s21
      %s239 = smul.u32 %s20, %s22
      %s240 = smul.u32 3, %s239
      %p241 = scmp.lt.s32.totalorder %s238, 1
      %s242 = scalar_select %p241, %s238, 1
      %p243 = scmp.lt.s32.totalorder %s240, 2
      %s244 = scalar_select %p243, %s240, 2
      %s245 = smul.addr %s242, 3
      %s246 = sadd.s32 %s244, %s245
      %s247 = smul.addr %s246, 8
      %s248 = scalar_lea.vmem %s4, %s247
      %s249 = smul.u32 %s20, %s21
      %s250 = smul.u32 %s20, %s22
      %s251 = smul.u32 3, %s250
      %s252 = sadd.s32 %s21, %s22
      %p253 = scmp.eq.s32.totalorder %s20, 0
      // Predicated region
      $region37: #{conv_bn_block.1} parent=35 // pred_check
        %p254 = pneg %p253
      $region38: #{conv_bn_block.1} parent=35 // pred_check_branch
        %256 = sbr.rel (%p254) target = $region40
      $region39: #{conv_bn_block.1} parent=35 // pred_region
        %p257 = scmp.eq.s32.totalorder %s21, 0
        %p258 = scmp.eq.s32.totalorder %s22, 0
        %p259 = pnand %p257, %p258
        %p260 = pneg %p259
        // Predicated region
        $region41: #{conv_bn_block.1} parent=39 // pred_check
          _
        $region42: #{conv_bn_block.1} parent=39 // pred_check_branch
          %262 = sbr.rel (%p259) target = $region44
        $region43: #{conv_bn_block.1} parent=39 // pred_region
          %vm263 = vcmask 7168
          %264 = vst.msk [vmem:[#allocation3] sm:$0xff] %vm263, 0.0
          %265 = vst.msk [vmem:[#allocation4] sm:$0xff] %vm263, 0.0
        $region44: #{conv_bn_block.1} parent=39 // pred_fallthru
          _
        %s266 = smul.u32 %s22, 384
        %s267 = sshra.s32 %s266, 7
        %s268 = sand.u32 %s266, 127
        %s269 = smul.addr %s267, 4
        %s270 = scalar_lea.vmem %s235, %s269
        %v271 = vld [vmem:[%s270] sm:$0xff]
        %v272 = vld [vmem:[%s270 + $0x8] sm:$0xff]
        %v275 = vcombine.high %v271, %v271
        %v277 = vcombine.low %v271, %v271
        %v278 = vcombine.low %v272, %v272
        %279 = vrot.lane.b32.xlu0 %v277, 127
        %v280 = vpop.permute.xlu0 %279
        %281 = vrot.lane.b32.xlu0 %v271, 127
        %v282 = vpop.permute.xlu0 %281
        %283 = vrot.lane.b32.xlu0 %v278, 127
        %v284 = vpop.permute.xlu0 %283
        %285 = vrot.lane.b32.xlu0 %v272, 127
        %v286 = vpop.permute.xlu0 %285
        %vm287 = vcmask 1039360
        %v288 = vsel %vm287, %v280, %v282
        %v289 = vsel %vm287, %v282, %v284
        %v290 = vsel %vm287, %v284, %v286
        %v294 = vcombine.high %v272, %v272
        %295 = vrot.lane.b32.xlu0 %v271, 126
        %v296 = vpop.permute.xlu0 %295
        %297 = vrot.lane.b32.xlu0 %v275, 126
        %v298 = vpop.permute.xlu0 %297
        %299 = vrot.lane.b32.xlu0 %v272, 126
        %v300 = vpop.permute.xlu0 %299
        %301 = vrot.lane.b32.xlu0 %v294, 126
        %v302 = vpop.permute.xlu0 %301
        %vm303 = vcmask 1031168
        %v304 = vsel %vm303, %v296, %v298
        %v305 = vsel %vm303, %v298, %v300
        %v306 = vsel %vm303, %v300, %v302
        %310 = vrot.lane.b32.xlu0 %v277, 110
        %v311 = vpop.permute.xlu0 %310
        %312 = vrot.lane.b32.xlu0 %v271, 110
        %v313 = vpop.permute.xlu0 %312
        %314 = vrot.lane.b32.xlu0 %v278, 110
        %v315 = vpop.permute.xlu0 %314
        %316 = vrot.lane.b32.xlu0 %v272, 110
        %v317 = vpop.permute.xlu0 %316
        %vm318 = vcmask 900096
        %v319 = vsel %vm318, %v311, %v313
        %v320 = vsel %vm318, %v313, %v315
        %v321 = vsel %vm318, %v315, %v317
        %325 = vrot.lane.b32.xlu0 %v271, 109
        %v326 = vpop.permute.xlu0 %325
        %327 = vrot.lane.b32.xlu0 %v275, 109
        %v328 = vpop.permute.xlu0 %327
        %329 = vrot.lane.b32.xlu0 %v272, 109
        %v330 = vpop.permute.xlu0 %329
        %331 = vrot.lane.b32.xlu0 %v294, 109
        %v332 = vpop.permute.xlu0 %331
        %vm333 = vcmask 891904
        %v334 = vsel %vm333, %v326, %v328
        %v335 = vsel %vm333, %v328, %v330
        %v336 = vsel %vm333, %v330, %v332
        %340 = vrot.lane.b32.xlu0 %v277, 108
        %v341 = vpop.permute.xlu0 %340
        %342 = vrot.lane.b32.xlu0 %v271, 108
        %v343 = vpop.permute.xlu0 %342
        %344 = vrot.lane.b32.xlu0 %v278, 108
        %v345 = vpop.permute.xlu0 %344
        %346 = vrot.lane.b32.xlu0 %v272, 108
        %v347 = vpop.permute.xlu0 %346
        %vm348 = vcmask 883712
        %v349 = vsel %vm348, %v341, %v343
        %v350 = vsel %vm348, %v343, %v345
        %v351 = vsel %vm348, %v345, %v347
        %355 = vrot.lane.b32.xlu0 %v271, 92
        %v356 = vpop.permute.xlu0 %355
        %357 = vrot.lane.b32.xlu0 %v275, 92
        %v358 = vpop.permute.xlu0 %357
        %359 = vrot.lane.b32.xlu0 %v272, 92
        %v360 = vpop.permute.xlu0 %359
        %361 = vrot.lane.b32.xlu0 %v294, 92
        %v362 = vpop.permute.xlu0 %361
        %vm363 = vcmask 752640
        %v364 = vsel %vm363, %v356, %v358
        %v365 = vsel %vm363, %v358, %v360
        %v366 = vsel %vm363, %v360, %v362
        %370 = vrot.lane.b32.xlu0 %v277, 91
        %v371 = vpop.permute.xlu0 %370
        %372 = vrot.lane.b32.xlu0 %v271, 91
        %v373 = vpop.permute.xlu0 %372
        %374 = vrot.lane.b32.xlu0 %v278, 91
        %v375 = vpop.permute.xlu0 %374
        %376 = vrot.lane.b32.xlu0 %v272, 91
        %v377 = vpop.permute.xlu0 %376
        %vm378 = vcmask 744448
        %v379 = vsel %vm378, %v371, %v373
        %v380 = vsel %vm378, %v373, %v375
        %v381 = vsel %vm378, %v375, %v377
        %385 = vrot.lane.b32.xlu0 %v271, 90
        %v386 = vpop.permute.xlu0 %385
        %387 = vrot.lane.b32.xlu0 %v275, 90
        %v388 = vpop.permute.xlu0 %387
        %389 = vrot.lane.b32.xlu0 %v272, 90
        %v390 = vpop.permute.xlu0 %389
        %391 = vrot.lane.b32.xlu0 %v294, 90
        %v392 = vpop.permute.xlu0 %391
        %vm393 = vcmask 736256
        %v394 = vsel %vm393, %v386, %v388
        %v395 = vsel %vm393, %v388, %v390
        %v396 = vsel %vm393, %v390, %v392
        %vm397 = vcmask 1043456
        %v398 = vsel %vm397, %v271, %v288
        %v399 = vsel %vm397, %v275, %v289
        %v400 = vsel %vm397, %v272, %v290
        %v401 = vsel %vm397, %v304, %v319
        %v402 = vsel %vm397, %v305, %v320
        %v403 = vsel %vm397, %v306, %v321
        %v404 = vsel %vm397, %v334, %v349
        %v405 = vsel %vm397, %v335, %v350
        %v406 = vsel %vm397, %v336, %v351
        %v407 = vsel %vm397, %v364, %v379
        %v408 = vsel %vm397, %v365, %v380
        %v409 = vsel %vm397, %v366, %v381
        %v410 = vld [vmem:[%s1] sm:$0xff]
        %vm411 = vcmask 293888
        %v413 = vsel %vm411, %v410, 0
        %v415 = vsel %vm397, %v394, 0
        %v417 = vsel %vm397, %v395, 0
        %v419 = vsel %vm397, %v396, 0
        %421 = vmatprep.subr.mxu0 0.0
        %422 = vmatpush1.msra.mxu0 0.0
        %423 = vmatprep.subr.mxu0 0.0
        %424 = vmatpush1.msra.mxu0 0.0
        %425 = vmatprep.subr.mxu0 0.0
        %426 = vmatpush1.msra.mxu0 0.0
        %427 = vmatprep.subr.mxu0 0.0
        %428 = vmatpush1.msra.mxu0 0.0
        %429 = vmatprep.subr.mxu0 0.0
        %430 = vmatpush1.msra.mxu0 0.0
        %431 = vmatprep.subr.mxu0 0.0
        %432 = vmatpush1.msra.mxu0 0.0
        %433 = vmatprep.subr.mxu0 0.0
        %434 = vmatpush1.msra.mxu0 0.0
        %435 = vmatprep.subr.mxu0 0.0
        %436 = vmatpush1.msra.mxu0 0.0
        %437 = vmatprep.subr.mxu0 0.0
        %438 = vmatpush1.msra.mxu0 0.0
        %439 = vmatprep.subr.mxu0 0.0
        %440 = vmatpush1.msra.mxu0 0.0
        %441 = vmatprep.subr.mxu0 0.0
        %442 = vmatpush1.msra.mxu0 0.0
        %443 = vmatprep.subr.mxu0 %v417
        %444 = vmatpush1.msra.mxu0 %v415
        %445 = vmatprep.subr.mxu0 %v408
        %446 = vmatpush1.msra.mxu0 %v407
        %447 = vmatprep.subr.mxu0 %v405
        %448 = vmatpush1.msra.mxu0 %v404
        %449 = vmatprep.subr.mxu0 %v402
        %450 = vmatpush1.msra.mxu0 %v401
        %451 = vmatprep.subr.mxu0 %v399
        %452 = vmatpush1.msra.mxu0 %v398
        %453 = vmatprep.subr.mxu0 0.0
        %454 = vmatpush2.msra.mxu0 0.0
        %455 = vmatprep.subr.mxu0 0.0
        %456 = vmatpush2.msra.mxu0 0.0
        %457 = vmatprep.subr.mxu0 0.0
        %458 = vmatpush2.msra.mxu0 0.0
        %459 = vmatprep.subr.mxu0 0.0
        %460 = vmatpush2.msra.mxu0 0.0
        %461 = vmatprep.subr.mxu0 0.0
        %462 = vmatpush2.msra.mxu0 0.0
        %463 = vmatprep.subr.mxu0 0.0
        %464 = vmatpush2.msra.mxu0 0.0
        %465 = vmatprep.subr.mxu0 0.0
        %466 = vmatpush2.msra.mxu0 0.0
        %467 = vmatprep.subr.mxu0 0.0
        %468 = vmatpush2.msra.mxu0 0.0
        %469 = vmatprep.subr.mxu0 0.0
        %470 = vmatpush2.msra.mxu0 0.0
        %471 = vmatprep.subr.mxu0 0.0
        %472 = vmatpush2.msra.mxu0 0.0
        %473 = vmatprep.subr.mxu0 0.0
        %474 = vmatpush2.msra.mxu0 0.0
        %475 = vmatprep.subr.mxu0 0.0
        %476 = vmatpush2.msra.mxu0 0.0
        %477 = vmatprep.subr.mxu0 0.0
        %478 = vmatpush2.msra.mxu0 0.0
        %479 = vmatprep.subr.mxu0 0.0
        %480 = vmatpush2.msra.mxu0 0.0
        %481 = vmatprep.subr.mxu0 0.0
        %482 = vmatpush2.msra.mxu0 0.0
        %483 = vmatprep.subr.mxu0 0.0
        %484 = vmatpush2.msra.mxu0 0.0
        %485 = vmatprep.mubr.f32.mxu0 0.0
        %486 = vmatmul.mubr.f32.gmra.mxu0 %v413
        %v487 = vpop.f32.mrf.mxu0
        %v488 = vadd.f32 0.0, %v487
        %v489 = vpop.f32.mrf.mxu0
        %v490 = vadd.f32 0.0, %v489
        %491 = vdwg.mxu0
        %492 = vmatprep.subr.mxu0 0.0
        %493 = vmatpush1.msra.mxu0 0.0
        %494 = vmatprep.subr.mxu0 0.0
        %495 = vmatpush1.msra.mxu0 0.0
        %496 = vmatprep.subr.mxu0 0.0
        %497 = vmatpush1.msra.mxu0 0.0
        %498 = vmatprep.subr.mxu0 0.0
        %499 = vmatpush1.msra.mxu0 0.0
        %500 = vmatprep.subr.mxu0 0.0
        %501 = vmatpush1.msra.mxu0 0.0
        %502 = vmatprep.subr.mxu0 0.0
        %503 = vmatpush1.msra.mxu0 0.0
        %504 = vmatprep.subr.mxu0 0.0
        %505 = vmatpush1.msra.mxu0 0.0
        %506 = vmatprep.subr.mxu0 0.0
        %507 = vmatpush1.msra.mxu0 0.0
        %508 = vmatprep.subr.mxu0 0.0
        %509 = vmatpush1.msra.mxu0 0.0
        %510 = vmatprep.subr.mxu0 0.0
        %511 = vmatpush1.msra.mxu0 0.0
        %512 = vmatprep.subr.mxu0 0.0
        %513 = vmatpush1.msra.mxu0 0.0
        %514 = vmatprep.subr.mxu0 0.0
        %515 = vmatpush1.msra.mxu0 %v419
        %516 = vmatprep.subr.mxu0 0.0
        %517 = vmatpush1.msra.mxu0 %v409
        %518 = vmatprep.subr.mxu0 0.0
        %519 = vmatpush1.msra.mxu0 %v406
        %520 = vmatprep.subr.mxu0 0.0
        %521 = vmatpush1.msra.mxu0 %v403
        %522 = vmatprep.subr.mxu0 0.0
        %523 = vmatpush1.msra.mxu0 %v400
        %524 = vmatprep.subr.mxu0 0.0
        %525 = vmatpush2.msra.mxu0 0.0
        %526 = vmatprep.subr.mxu0 0.0
        %527 = vmatpush2.msra.mxu0 0.0
        %528 = vmatprep.subr.mxu0 0.0
        %529 = vmatpush2.msra.mxu0 0.0
        %530 = vmatprep.subr.mxu0 0.0
        %531 = vmatpush2.msra.mxu0 0.0
        %532 = vmatprep.subr.mxu0 0.0
        %533 = vmatpush2.msra.mxu0 0.0
        %534 = vmatprep.subr.mxu0 0.0
        %535 = vmatpush2.msra.mxu0 0.0
        %536 = vmatprep.subr.mxu0 0.0
        %537 = vmatpush2.msra.mxu0 0.0
        %538 = vmatprep.subr.mxu0 0.0
        %539 = vmatpush2.msra.mxu0 0.0
        %540 = vmatprep.subr.mxu0 0.0
        %541 = vmatpush2.msra.mxu0 0.0
        %542 = vmatprep.subr.mxu0 0.0
        %543 = vmatpush2.msra.mxu0 0.0
        %544 = vmatprep.subr.mxu0 0.0
        %545 = vmatpush2.msra.mxu0 0.0
        %546 = vmatprep.subr.mxu0 0.0
        %547 = vmatpush2.msra.mxu0 0.0
        %548 = vmatprep.subr.mxu0 0.0
        %549 = vmatpush2.msra.mxu0 0.0
        %550 = vmatprep.subr.mxu0 0.0
        %551 = vmatpush2.msra.mxu0 0.0
        %552 = vmatprep.subr.mxu0 0.0
        %553 = vmatpush2.msra.mxu0 0.0
        %554 = vmatprep.subr.mxu0 0.0
        %555 = vmatpush2.msra.mxu0 0.0
        %556 = vmatprep.mubr.f32.mxu0 0.0
        %557 = vmatmul.mubr.f32.gmra.mxu0 %v413
        %v558 = vpop.f32.mrf.mxu0
        %v559 = vadd.f32 0.0, %v558
        %v560 = vpop.f32.mrf.mxu0
        %561 = vdwg.mxu0
        %s562 = smul.u32 %s252, 3
        %s563 = smul.addr %s562, 8
        %s564 = scalar_lea.vmem [#allocation2], %s563
        %565 = vst [vmem:[%s564] sm:$0xff] %v488
        %566 = vst [vmem:[%s564 + $0x8] sm:$0xff] %v490
        %567 = vst [vmem:[%s564 + $0x10] sm:$0xff] %v559
        %v568 = vlaneseq
        %v569 = vand.u32 %v568, 127
        %v570 = vadd.s32 %v569, 128
        %v571 = vadd.s32 %v569, 256
        %v572 = vstv %s266
        %v573 = vadd.s32 %v572, %v569
        %v574 = vadd.s32 %v572, %v570
        %v575 = vadd.s32 %v572, %v571
        %v576 = vcvt.s32.f32 %v573
        %v577 = vcvt.s32.f32 %v574
        %v578 = vcvt.s32.f32 %v575
        %v579 = vadd.f32 %v576, 0.5
        %v580 = vadd.f32 %v577, 0.5
        %v581 = vadd.f32 %v578, 0.5
        %v582 = vmul.f32 %v579, 0.055555556
        %v583 = vmul.f32 %v580, 0.055555556
        %v584 = vmul.f32 %v581, 0.055555556
        %v585 = vfloor.f32 %v582
        %v586 = vfloor.f32 %v583
        %v587 = vfloor.f32 %v584
        %v588 = vmul.f32 %v585, 18.0
        %v589 = vmul.f32 %v586, 18.0
        %v590 = vmul.f32 %v587, 18.0
        %v591 = vsub.f32 %v576, %v588
        %v592 = vsub.f32 %v577, %v589
        %v593 = vsub.f32 %v578, %v590
        %vm594 = vcmp.lt.f32.partialorder %v591, 16.0
        %vm595 = vcmp.lt.f32.partialorder %v592, 16.0
        %vm596 = vcmp.lt.f32.partialorder %v593, 16.0
        %vm597 = vcmp.lt.s32.totalorder %v573, 288
        %vm598 = vcmp.lt.s32.totalorder %v574, 288
        %vm599 = vcmp.lt.s32.totalorder %v575, 288
        %vm600 = vmand %vm594, %vm597
        %vm601 = vmand %vm595, %vm598
        %vm602 = vmand %vm596, %vm599
        %v603 = vsel %vm600, 1, 0
        %v604 = vsel %vm601, 1, 0
        %v605 = vsel %vm602, 1, 0
        %v606 = vcvt.s32.f32 %v603
        %v607 = vcvt.s32.f32 %v604
        %v608 = vcvt.s32.f32 %v605
        %v609 = vmul.f32 %v488, %v606
        %v610 = vmul.f32 %v490, %v607
        %v611 = vmul.f32 %v559, %v608
        %v612 = vld [vmem:[#allocation3] sm:$0xff]
        %v613 = vadd.f32 %v609, %v610
        %v614 = vadd.f32 %v613, %v611
        %615 = vadd.xlane.f32.xlu0 %v614
        %v616 = vpop.xlane.xlu0 %615
        %v617 = vadd.f32 %v612, %v616
        %vm618 = vcmask 7168
        %619 = vst.msk [vmem:[#allocation3] sm:$0xff] %vm618, %v617
        %v620 = vld [vmem:[#allocation4] sm:$0xff]
        %v621 = vmul.f32 %v609, %v488
        %v622 = vmul.f32 %v610, %v490
        %v623 = vmul.f32 %v611, %v559
        %v624 = vadd.f32 %v621, %v622
        %v625 = vadd.f32 %v624, %v623
        %626 = vadd.xlane.f32.xlu0 %v625
        %v627 = vpop.xlane.xlu0 %626
        %v628 = vadd.f32 %v620, %v627
        %629 = vst.msk [vmem:[#allocation4] sm:$0xff] %vm618, %v628
      $region40: #{conv_bn_block.1} parent=35 // pred_fallthru
        _
      %p630 = scmp.eq.s32.totalorder %s20, 1
      // Predicated region
      $region45: #{conv_bn_block.1} parent=35 // pred_check
        %p631 = pneg %p630
      $region46: #{conv_bn_block.1} parent=35 // pred_check_branch
        %633 = sbr.rel (%p631) target = $region48
      $region47: #{conv_bn_block.1} parent=35 // pred_region
        %p634 = scmp.eq.s32.totalorder %s21, 0
        %p635 = scmp.eq.s32.totalorder %s22, 0
        %p636 = pnand %p634, %p635
        %p637 = pneg %p636
        // Predicated region
        $region49: #{conv_bn_block.1} parent=47 // pred_check
          _
        $region50: #{conv_bn_block.1} parent=47 // pred_check_branch
          %639 = sbr.rel (%p636) target = $region52
        $region51: #{conv_bn_block.1} parent=47 // pred_region
          %v640 = vld [vmem:[#allocation3] sm:$0xff]
          %v641 = vmul.f32 %v640, 0.001953125
          %v642 = vld [vmem:[#allocation4] sm:$0xff]
          %v643 = vmul.f32 %v642, 0.001953125
          %v644 = vmul.f32 %v641, %v641
          %v645 = vsub.f32 %v643, %v644
          %v646 = vmax.f32 %v645, 0.0
          %v647 = vadd.f32 %v646, 1e-05
          %v648 = vrsqrt.pop %v647
          %v649 = vld [vmem:[%s2] sm:$0xff]
          %v650 = vmul.f32 %v649, %v648
          %vm651 = vcmask 7168
          %652 = vst.msk [vmem:[#allocation5] sm:$0xff] %vm651, %v650
          %v653 = vld [vmem:[%s3] sm:$0xff]
          %v654 = vmul.f32 %v650, %v641
          %v655 = vsub.f32 %v653, %v654
          %656 = vst.msk [vmem:[#allocation6] sm:$0xff] %vm651, %v655
        $region52: #{conv_bn_block.1} parent=47 // pred_fallthru
          _
        %s657 = smul.u32 %s252, 3
        %s658 = smul.addr %s657, 8
        %s659 = scalar_lea.vmem [#allocation2], %s658
        %v660 = vld [vmem:[%s659] sm:$0xff]
        %v661 = vld [vmem:[%s659 + $0x8] sm:$0xff]
        %v662 = vld [vmem:[%s659 + $0x10] sm:$0xff]
        %v663 = vld [vmem:[#allocation5] sm:$0xff]
        %665 = vset.pattern.permute.xlu0 0
        %666 = vperm.xlu0 %665, %v663
        %v667 = vpop.permute.xlu0 %666
        %v669 = vmul.f32 %v660, %v667
        %v670 = vmul.f32 %v661, %v667
        %v671 = vmul.f32 %v662, %v667
        %v672 = vld [vmem:[#allocation6] sm:$0xff]
        %674 = vset.pattern.permute.xlu0 0
        %675 = vperm.xlu0 %674, %v672
        %v676 = vpop.permute.xlu0 %675
        %v678 = vadd.f32 %v669, %v676
        %v679 = vadd.f32 %v670, %v676
        %v680 = vadd.f32 %v671, %v676
        %vm681 = vcmp.gt.f32.partialorder %v678, 0.0
        %vm682 = vcmp.gt.f32.partialorder %v679, 0.0
        %vm683 = vcmp.gt.f32.partialorder %v680, 0.0
        %v684 = vmul.f32 %v678, 0.1
        %v685 = vmul.f32 %v679, 0.1
        %v686 = vmul.f32 %v680, 0.1
        %v687 = vsel %vm681, %v678, %v684
        %v688 = vsel %vm682, %v679, %v685
        %v689 = vsel %vm683, %v680, %v686
        %690 = vst [vmem:[%s248] sm:$0xff] %v687
        %691 = vst [vmem:[%s248 + $0x8] sm:$0xff] %v688
        %692 = vst [vmem:[%s248 + $0x10] sm:$0xff] %v689
      $region48: #{conv_bn_block.1} parent=35 // pred_fallthru
        _
      %s693 = smul.u32 %s20, %s21
      %s694 = smul.u32 %s20, %s22
      %s695 = smul.u32 3, %s694
      %p696 = scmp.lt.s32.totalorder %s693, 1
      %s697 = scalar_select %p696, %s693, 1
      %p698 = scmp.lt.s32.totalorder %s695, 2
      %s699 = scalar_select %p698, %s695, 2
      %s700 = smul.addr %s697, 3
      %s701 = sadd.s32 %s699, %s700
      %s702 = smul.addr %s701, 8
      %s703 = scalar_lea.vmem %s4, %s702
      // Predicated region
      $region53: #{conv_bn_block.1} parent=35 // pred_check
        %p704 = pneg %p151
      $region54: #{conv_bn_block.1} parent=35 // pred_check_branch
        %706 = sbr.rel (%p704) target = $region56
      $region55: #{conv_bn_block.1} parent=35 // pred_region
        %s707 = smul.u32 %s20, %s21
        %s708 = smul.u32 %s20, %s22
        %s709 = smul.u32 3, %s708
      $region56: #{conv_bn_block.1} parent=35 // pred_fallthru
        _
    $region36: #{conv_bn_block.1} parent=5 // pred_fallthru
      _
    %p710 = scmp.le.s32.totalorder 2, %s10
    // Predicated region
    $region57: #{conv_bn_block.1} parent=5 // pred_check
      %p711 = pneg %p710
    $region58: #{conv_bn_block.1} parent=5 // pred_check_branch
      %713 = sbr.rel (%p711) target = $region60
    $region59: #{conv_bn_block.1} parent=5 // pred_region
      %s714 = ssub.s32 %s10, 2
      // Predicated region
      $region61: #{conv_bn_block.1} parent=59 // pred_check
        %p715 = pneg %p157
      $region62: #{conv_bn_block.1} parent=59 // pred_check_branch
        %717 = sbr.rel (%p715) target = $region64
      $region63: #{conv_bn_block.1} parent=59 // pred_region
        %s718 = smul.u32 %s23, %s24
        %s719 = smul.u32 %s23, %s25
        %s720 = smul.u32 3, %s719
        %p721 = scmp.lt.s32.totalorder %s718, 1
        %s722 = scalar_select %p721, %s718, 1
        %p723 = scmp.lt.s32.totalorder %s720, 2
        %s724 = scalar_select %p723, %s720, 2
        %s725 = smul.addr %s722, 3
        %s726 = sadd.s32 %s724, %s725
        %s727 = smul.addr %s726, 8
        %s728 = scalar_lea.vmem %s4, %s727
      $region64: #{conv_bn_block.1} parent=59 // pred_fallthru
        _
    $region60: #{conv_bn_block.1} parent=5 // pred_fallthru
      _
  $region6: #{conv_bn_block.1} parent=0 // loop_footer
    %s14 = sadd.s32 1, %s10
  $region7: #{conv_bn_block.1} parent=0 // loop_footer_branch
    %9 = sbr.rel target = $region3
  $region8: #{conv_bn_block.1} parent=0 // loop_exit
    _

</llo_original>
